<compile_context>
chip_gen: v7x
topology: tpu7x:2x2x1
jax: 0.10.0
libtpu: 0.0.40
codegen_flags: <defaults>
</compile_context>

<pallas_src>
import jax
import jax.numpy as jnp
from jax.experimental import pallas as pl
from jax.experimental.pallas import tpu as pltpu

# Layer dims of the PyTorch DQN (fc1: 4->10, fc2: 10->15, fc3: 15->2).
D_IN, D_H1, D_H2, D_OUT = 4, 10, 15, 2

# Packed-parameter slab: every sub-block starts at an 8-row-aligned offset of a
# single (80, 128) f32 slab (40 KiB in VMEM, one DMA, resident across the grid).
# Rows between/around the real data are zero, so the 8/16-row-aligned slices the
# kernel takes are numerically equivalent to the exact-shaped weights.
_ROW_W1, _ROW_B1 = 0, 16
_ROW_W2, _ROW_B2 = 32, 48
_ROW_W3, _ROW_B3 = 64, 72
_SLAB_ROWS, _SLAB_COLS = 80, 128

_LANE = 128
_TB_MAX = 8192  # (8, 8192) f32 tile = 256 KiB per pipeline buffer (tiny vs VMEM)


def _round_up(n, m):
    return (n + m - 1) // m * m


def _choose_tb(B):
    """Pick the batch-tile (lane) width: one big step for small batches, >= 2
    balanced tiles for large batches so both v7x TensorCores get work."""
    Bp = _round_up(max(B, 1), _LANE)
    if Bp <= 1024:
        return Bp                              # single grid step (overhead-bound regime)
    nt = max(2, pl.cdiv(Bp, _TB_MAX))          # >= 2 tiles; cap tile size
    return _round_up(pl.cdiv(Bp, nt), _LANE)


def dqn_kernel(p_ref, x_ref, out_ref):
    # 8-sublane-aligned static slices out of the resident parameter slab
    # (PyTorch (out_features, in_features) layout; zero padding is inert).
    w1 = p_ref[_ROW_W1:_ROW_W1 + 16, 0:8]    # (16, 8)  real block: (10, 4)
    b1 = p_ref[_ROW_B1:_ROW_B1 + 16, 0:1]    # (16, 1)  real block: (10, 1)
    w2 = p_ref[_ROW_W2:_ROW_W2 + 16, 0:16]   # (16, 16) real block: (15, 10)
    b2 = p_ref[_ROW_B2:_ROW_B2 + 16, 0:1]    # (16, 1)  real block: (15, 1)
    w3 = p_ref[_ROW_W3:_ROW_W3 + 8, 0:16]    # (8, 16)  real block: (2, 15)
    b3 = p_ref[_ROW_B3:_ROW_B3 + 8, 0:1]     # (8, 1)   real block: (2, 1)

    x = x_ref[...]                            # (8, TB): rows 0..3 = features, 4..7 padding
    # w1 cols 4..7 are zero, so the padding rows of x never contribute.
    h1 = jnp.maximum(jnp.dot(w1, x, preferred_element_type=jnp.float32) + b1, 0.0)   # (16, TB)
    h2 = jnp.maximum(jnp.dot(w2, h1, preferred_element_type=jnp.float32) + b2, 0.0)  # (16, TB)
    q = jnp.dot(w3, h2, preferred_element_type=jnp.float32) + b3                      # (8, TB)
    out_ref[...] = q.astype(out_ref.dtype)    # rows 0..1 = Q-values, rows 2..7 = 0


def pack_params(params):
    """Pack (w1, b1, w2, b2, w3, b3) in PyTorch (out, in) layout into one padded slab."""
    w1, b1, w2, b2, w3, b3 = params
    slab = jnp.zeros((_SLAB_ROWS, _SLAB_COLS), jnp.float32)
    slab = slab.at[_ROW_W1:_ROW_W1 + D_H1, 0:D_IN].set(w1.astype(jnp.float32))
    slab = slab.at[_ROW_B1:_ROW_B1 + D_H1, 0:1].set(b1.reshape(-1, 1).astype(jnp.float32))
    slab = slab.at[_ROW_W2:_ROW_W2 + D_H2, 0:D_H1].set(w2.astype(jnp.float32))
    slab = slab.at[_ROW_B2:_ROW_B2 + D_H2, 0:1].set(b2.reshape(-1, 1).astype(jnp.float32))
    slab = slab.at[_ROW_W3:_ROW_W3 + D_OUT, 0:D_H2].set(w3.astype(jnp.float32))
    slab = slab.at[_ROW_B3:_ROW_B3 + D_OUT, 0:1].set(b3.reshape(-1, 1).astype(jnp.float32))
    return slab


def _dqn_pallas(x8, param_slab):
    """x8: (8, B) f32 feature-major slab. Returns (8, B) f32 with Q in rows 0..1."""
    B = x8.shape[1]
    TB = _choose_tb(B)
    nb = pl.cdiv(B, TB)
    flops = 2 * (D_IN * D_H1 + D_H1 * D_H2 + D_H2 * D_OUT) * B
    bytes_accessed = 2 * 8 * B * 4 + _SLAB_ROWS * _SLAB_COLS * 4
    return pl.pallas_call(
        dqn_kernel,
        out_shape=jax.ShapeDtypeStruct((8, B), jnp.float32),
        grid=(nb,),
        in_specs=[
            # Parameter slab: same block every step -> stays resident in VMEM.
            pl.BlockSpec((_SLAB_ROWS, _SLAB_COLS), lambda i: (0, 0)),
            # Streamed batch tiles; TB is a multiple of 128 (unmasked, lane-dense).
            pl.BlockSpec((8, TB), lambda i: (0, i)),
        ],
        out_specs=pl.BlockSpec((8, TB), lambda i: (0, i)),
        compiler_params=pltpu.CompilerParams(
            dimension_semantics=("parallel",),  # shard batch tiles across TCs (v7x)
        ),
        cost_estimate=pl.CostEstimate(
            flops=flops, transcendentals=0, bytes_accessed=bytes_accessed),
    )(param_slab, x8)


@jax.jit
def dqn_forward_fm(x8, param_slab):
    """Zero-copy fast path.

    x8: (8, B) f32, feature-major: rows 0..3 hold the 4 state features, rows 4..7
    are padding (keep them finite, e.g. zero; they are multiplied by zero weights).
    Returns (8, B) f32 with Q-values in rows 0..1 (rows 2..7 are zero).
    """
    return _dqn_pallas(x8, param_slab)


@jax.jit
def dqn_forward(x, param_slab):
    """PyTorch-interface wrapper. x: (B, 4) f32 states. Returns (B, 2) f32 Q-values.

    The (B,4)->(8,Bp) transpose/pad is an inherent layout conversion for this
    interface; store the replay buffer feature-major and use dqn_forward_fm to
    avoid it entirely.
    """
    B = x.shape[0]
    Bp = _round_up(max(B, 1), _LANE)
    x8 = jnp.zeros((8, Bp), jnp.float32).at[:D_IN, :B].set(x.T.astype(jnp.float32))
    q8 = _dqn_pallas(x8, param_slab)
    return q8[:D_OUT, :B].T


def init_params(key):
    """Deterministic init mimicking nn.Linear: U(-1/sqrt(fan_in), 1/sqrt(fan_in)).

    Weights are kept in PyTorch (out_features, in_features) layout.
    """
    dims = [(D_IN, D_H1), (D_H1, D_H2), (D_H2, D_OUT)]
    params = []
    for fan_in, fan_out in dims:
        key, kw, kb = jax.random.split(key, 3)
        bound = float(fan_in) ** -0.5
        w = jax.random.uniform(kw, (fan_out, fan_in), jnp.float32, -bound, bound)
        b = jax.random.uniform(kb, (fan_out,), jnp.float32, -bound, bound)
        params.extend([w, b])
    return tuple(params)


def dqn_reference(x, params):
    """Pure-JAX reference (matches the PyTorch forward)."""
    w1, b1, w2, b2, w3, b3 = params
    h1 = jnp.maximum(x @ w1.T + b1, 0.0)
    h2 = jnp.maximum(h1 @ w2.T + b2, 0.0)
    return h2 @ w3.T + b3


# TODO(synk): Adam optimizer / MSELoss / .to(device) from the PyTorch module are
# training-side machinery, not part of the forward pass, and are not translated.

if __name__ == "__main__":
    key = jax.random.PRNGKey(0)
    kp, kx1, kx2, kx3 = jax.random.split(key, 4)

    params = init_params(kp)
    slab = pack_params(params)

    # 1) PyTorch-style interface: (B, 4) -> (B, 2), typical replay batch (1 grid step).
    batch = 256
    x = jax.random.normal(kx1, (batch, D_IN), jnp.float32)
    q_values = dqn_forward(x, slab)
    jax.block_until_ready(q_values)
    assert q_values.shape == (batch, D_OUT)
    assert jnp.allclose(q_values, dqn_reference(x, params), atol=2e-5, rtol=2e-5)

    # 2) Non-multiple-of-128 batch (padded inside the wrapper, sliced on return).
    x_small = jax.random.normal(kx2, (37, D_IN), jnp.float32)
    q_small = dqn_forward(x_small, slab)
    jax.block_until_ready(q_small)
    assert q_small.shape == (37, D_OUT)
    assert jnp.allclose(q_small, dqn_reference(x_small, params), atol=2e-5, rtol=2e-5)

    # 3) Zero-copy feature-major fast path, large enough to split across 2 tiles
    #    (both TensorCores on v7x; still a single sequential loop on v5e/v6e).
    b_fm = 2048
    x_big = jax.random.normal(kx3, (b_fm, D_IN), jnp.float32)
    x8 = jnp.zeros((8, b_fm), jnp.float32).at[:D_IN].set(x_big.T)
    q8 = dqn_forward_fm(x8, slab)
    jax.block_until_ready(q8)
    assert q8.shape == (8, b_fm)
    assert jnp.allclose(q8[:D_OUT].T, dqn_reference(x_big, params), atol=2e-5, rtol=2e-5)
    assert jnp.allclose(q8[D_OUT:], 0.0)

    print("KERNEL_OK")
</pallas_src>

<mosaic_0001>
module attributes {stable_mosaic.version = 11 : i64} {
  func.func @dqn_kernel(%arg0: i32, %arg1: memref<80x128xf32, #tpu.memory_space<vmem>>, %arg2: memref<8x256xf32, #tpu.memory_space<vmem>>, %arg3: memref<8x256xf32, #tpu.memory_space<vmem>>) attributes {dimension_semantics = [#tpu.dimension_semantics<parallel>], iteration_bounds = array<i64: 1>, scalar_prefetch = 0 : i64, scratch_operands = 0 : i64, tpu.core_type = #tpu.core_type<tc>, window_params = [{pipeline_mode = #tpu.pipeline_mode<synchronous>, transform_indices = @transform_0, window_bounds = array<i64: 80, 128>}, {transform_indices = @transform_1, window_bounds = array<i64: 8, 256>}, {transform_indices = @transform_2, window_bounds = array<i64: 8, 256>}]} {
    %c0 = arith.constant 0 : index
    %c0_0 = arith.constant 0 : index
    %0 = vector.load %arg1[%c0, %c0_0] : memref<80x128xf32, #tpu.memory_space<vmem>>, vector<16x8xf32>
    %c16 = arith.constant 16 : index
    %c0_1 = arith.constant 0 : index
    %1 = vector.load %arg1[%c16, %c0_1] : memref<80x128xf32, #tpu.memory_space<vmem>>, vector<16x1xf32>
    %c32 = arith.constant 32 : index
    %c0_2 = arith.constant 0 : index
    %2 = vector.load %arg1[%c32, %c0_2] : memref<80x128xf32, #tpu.memory_space<vmem>>, vector<16x16xf32>
    %c48 = arith.constant 48 : index
    %c0_3 = arith.constant 0 : index
    %3 = vector.load %arg1[%c48, %c0_3] : memref<80x128xf32, #tpu.memory_space<vmem>>, vector<16x1xf32>
    %c64 = arith.constant 64 : index
    %c0_4 = arith.constant 0 : index
    %4 = vector.load %arg1[%c64, %c0_4] : memref<80x128xf32, #tpu.memory_space<vmem>>, vector<8x16xf32>
    %c72 = arith.constant 72 : index
    %c0_5 = arith.constant 0 : index
    %5 = vector.load %arg1[%c72, %c0_5] : memref<80x128xf32, #tpu.memory_space<vmem>>, vector<8x1xf32>
    %c0_6 = arith.constant 0 : index
    %c0_7 = arith.constant 0 : index
    %6 = vector.load %arg2[%c0_6, %c0_7] : memref<8x256xf32, #tpu.memory_space<vmem>>, vector<8x256xf32>
    %cst = arith.constant dense<0.000000e+00> : vector<16x256xf32>
    %7 = tpu.matmul %0, %6, %cst {dimension_numbers = #tpu.dot_dimension_numbers<[1], [0], [0], [1], [0, 0, 1, 1], [], []>} : vector<16x8xf32>, vector<8x256xf32>, vector<16x256xf32> -> vector<16x256xf32>
    %8 = vector.broadcast %1 : vector<16x1xf32> to vector<16x256xf32>
    %9 = arith.addf %7, %8 : vector<16x256xf32>
    %cst_8 = arith.constant 0.000000e+00 : f32
    %10 = vector.broadcast %cst_8 : f32 to vector<16x256xf32>
    %11 = arith.maximumf %9, %10 : vector<16x256xf32>
    %cst_9 = arith.constant dense<0.000000e+00> : vector<16x256xf32>
    %12 = tpu.matmul %2, %11, %cst_9 {dimension_numbers = #tpu.dot_dimension_numbers<[1], [0], [0], [1], [0, 0, 1, 1], [], []>} : vector<16x16xf32>, vector<16x256xf32>, vector<16x256xf32> -> vector<16x256xf32>
    %13 = vector.broadcast %3 : vector<16x1xf32> to vector<16x256xf32>
    %14 = arith.addf %12, %13 : vector<16x256xf32>
    %cst_10 = arith.constant 0.000000e+00 : f32
    %15 = vector.broadcast %cst_10 : f32 to vector<16x256xf32>
    %16 = arith.maximumf %14, %15 : vector<16x256xf32>
    %cst_11 = arith.constant dense<0.000000e+00> : vector<8x256xf32>
    %17 = tpu.matmul %4, %16, %cst_11 {dimension_numbers = #tpu.dot_dimension_numbers<[1], [0], [0], [1], [0, 0, 1, 1], [], []>} : vector<8x16xf32>, vector<16x256xf32>, vector<8x256xf32> -> vector<8x256xf32>
    %18 = vector.broadcast %5 : vector<8x1xf32> to vector<8x256xf32>
    %19 = arith.addf %17, %18 : vector<8x256xf32>
    %c0_12 = arith.constant 0 : index
    %c0_13 = arith.constant 0 : index
    %20 = vector.load %arg3[%c0_12, %c0_13] : memref<8x256xf32, #tpu.memory_space<vmem>>, vector<8x256xf32>
    tpu.vector_store %arg3[%c0_12, %c0_13], %19 {strides = array<i32>} : memref<8x256xf32, #tpu.memory_space<vmem>>, vector<8x256xf32>,
    return
  }
  func.func @transform_0(%arg0: i32) -> (i32, i32) {
    %c0_i32 = arith.constant 0 : i32
    %c0_i32_0 = arith.constant 0 : i32
    %c0_i32_1 = arith.constant 0 : i32
    return %c0_i32, %c0_i32_0 : i32, i32
  }
  func.func @transform_1(%arg0: i32) -> (i32, i32) {
    %c0_i32 = arith.constant 0 : i32
    %c0_i32_0 = arith.constant 0 : i32
    return %c0_i32, %arg0 : i32, i32
  }
  func.func @transform_2(%arg0: i32) -> (i32, i32) {
    %c0_i32 = arith.constant 0 : i32
    %c0_i32_0 = arith.constant 0 : i32
    return %c0_i32, %arg0 : i32, i32
  }
}

</mosaic_0001>

<llo_original>
// kernel: dqn_forward.1
$region0: #{dqn_forward.1}
  #allocation0 [shape = 'u32[]', space=smem, size = 0x4, offset = 0x4, fixed_abs, tag = 'smem constant byte address 0x4 - core index']
  #allocation1 [shape = 'u32[144,128]{1,0:T(1,128)}', space=vmem, size = 0x12000, scoped, tag = 'internal scratch']
  %s0 = inlined_call_operand.hbm [shape: f32[80,128], index: 0, kind: input, shape index: {}]
  %s1 = inlined_call_operand.vmem [shape: f32[8,256], index: 1, kind: input, shape index: {}]
  %s2 = inlined_call_operand.vmem [shape: f32[8,256], index: 2, kind: output, shape index: {}]
  %s3 = sld [smem:[#allocation0]]
  $region22: #{dqn_forward.1} parent=0
    _
  %s5 = ssub.s32 1, %s3
  %s6 = scalar_select 0, %s5, %s3
  $region1: #{dqn_forward.1} parent=0
    #allocation2 [shape = 'u8[40960]{0}', space=vmem, size = 0xa000, scoped, tag = 'input window, operand 0, single buffered']
    #allocation3 [shape = 's32[1]{0}', space=sflag, size = 0x4, scoped, tag = 'scoped memory for dqn_forward.1']
    %7 = vsyncpa [#allocation3], 0
    // Predicated region
    $region2: #{dqn_forward.1} parent=1 // pred_check
      _
    $region3: #{dqn_forward.1} parent=1 // pred_check_branch
      %9 = sbr.rel (0) target = $region5
    $region4: #{dqn_forward.1} parent=1 // pred_region
      %s11 = ssub.s32 1280, 1280
      %12 = vsyncadd [#allocation3], %s11
      %s13 = sshll.u32 [#allocation2], 4
      %s14 = int_to_ptr.vmem [resolvable:$true] %s13
      %19 = dma.hbm_to_vmem [thread:$0]  %s0, 1280, %s14, [#allocation3], 128, 128, 8
    $region5: #{dqn_forward.1} parent=1 // pred_fallthru
      _
    // Predicated region
    $region6: #{dqn_forward.1} parent=1 // pred_check
      _
    $region7: #{dqn_forward.1} parent=1 // pred_check_branch
      %21 = sbr.rel (0) target = $region9
    $region8: #{dqn_forward.1} parent=1 // pred_region
      _
    $region9: #{dqn_forward.1} parent=1 // pred_fallthru
      _
    // Predicated region
    $region10: #{dqn_forward.1} parent=1 // pred_check
      _
    $region11: #{dqn_forward.1} parent=1 // pred_check_branch
      %23 = sbr.rel (0) target = $region13
    $region12: #{dqn_forward.1} parent=1 // pred_region
      %24 = dma.done [#allocation3], 1280
    $region13: #{dqn_forward.1} parent=1 // pred_fallthru
      _
    %v25 = vld [vmem:[#allocation2] sm:$0xff]
    %v26 = vld [vmem:[#allocation2 + $0x8] sm:$0xff]
    %v27 = vld [vmem:[#allocation2 + $0x10] sm:$0xff]
    %v28 = vld [vmem:[#allocation2 + $0x18] sm:$0xff]
    %v29 = vld [vmem:[#allocation2 + $0x20] sm:$0xff]
    %v30 = vld [vmem:[#allocation2 + $0x28] sm:$0xff]
    %v31 = vld [vmem:[#allocation2 + $0x30] sm:$0xff]
    %v32 = vld [vmem:[#allocation2 + $0x38] sm:$0xff]
    %v33 = vld [vmem:[#allocation2 + $0x40] sm:$0xff]
    %v34 = vld [vmem:[#allocation2 + $0x48] sm:$0xff]
    %v35 = vld [vmem:[%s1] sm:$0xff]
    %v36 = vld [vmem:[%s1 + $0x8] sm:$0xff]
    %38 = vset.pattern.permute.xlu0 0
    %39 = vperm.xlu0 %38, %v27
    %v40 = vpop.permute.xlu0 %39
    %43 = vset.pattern.permute.xlu0 0
    %44 = vperm.xlu0 %43, %v28
    %v45 = vpop.permute.xlu0 %44
    %vm47 = vcmask 64512
    %v49 = vsel %vm47, %v25, 0
    %v52 = vsel %vm47, %v26, 0
    %54 = vmatprep.subr.mxu0 %v36
    %55 = vmatpush1.msra.mxu0 %v35
    %56 = vmatprep.subr.mxu0 0.0
    %57 = vmatpush1.msra.mxu0 0.0
    %58 = vmatprep.subr.mxu0 0.0
    %59 = vmatpush1.msra.mxu0 0.0
    %60 = vmatprep.subr.mxu0 0.0
    %61 = vmatpush1.msra.mxu0 0.0
    %62 = vmatprep.subr.mxu0 0.0
    %63 = vmatpush1.msra.mxu0 0.0
    %64 = vmatprep.subr.mxu0 0.0
    %65 = vmatpush1.msra.mxu0 0.0
    %66 = vmatprep.subr.mxu0 0.0
    %67 = vmatpush1.msra.mxu0 0.0
    %68 = vmatprep.subr.mxu0 0.0
    %69 = vmatpush1.msra.mxu0 0.0
    %70 = vmatprep.subr.mxu0 0.0
    %71 = vmatpush1.msra.mxu0 0.0
    %72 = vmatprep.subr.mxu0 0.0
    %73 = vmatpush1.msra.mxu0 0.0
    %74 = vmatprep.subr.mxu0 0.0
    %75 = vmatpush1.msra.mxu0 0.0
    %76 = vmatprep.subr.mxu0 0.0
    %77 = vmatpush1.msra.mxu0 0.0
    %78 = vmatprep.subr.mxu0 0.0
    %79 = vmatpush1.msra.mxu0 0.0
    %80 = vmatprep.subr.mxu0 0.0
    %81 = vmatpush1.msra.mxu0 0.0
    %82 = vmatprep.subr.mxu0 0.0
    %83 = vmatpush1.msra.mxu0 0.0
    %84 = vmatprep.subr.mxu0 0.0
    %85 = vmatpush1.msra.mxu0 0.0
    %86 = vmatprep.subr.mxu0 0.0
    %87 = vmatpush1.msra.mxu0 0.0
    %88 = vmatprep.subr.mxu0 0.0
    %89 = vmatpush1.msra.mxu0 0.0
    %90 = vmatprep.subr.mxu0 0.0
    %91 = vmatpush1.msra.mxu0 0.0
    %92 = vmatprep.subr.mxu0 0.0
    %93 = vmatpush1.msra.mxu0 0.0
    %94 = vmatprep.subr.mxu0 0.0
    %95 = vmatpush1.msra.mxu0 0.0
    %96 = vmatprep.subr.mxu0 0.0
    %97 = vmatpush1.msra.mxu0 0.0
    %98 = vmatprep.subr.mxu0 0.0
    %99 = vmatpush1.msra.mxu0 0.0
    %100 = vmatprep.subr.mxu0 0.0
    %101 = vmatpush1.msra.mxu0 0.0
    %102 = vmatprep.subr.mxu0 0.0
    %103 = vmatpush1.msra.mxu0 0.0
    %104 = vmatprep.subr.mxu0 0.0
    %105 = vmatpush1.msra.mxu0 0.0
    %106 = vmatprep.subr.mxu0 0.0
    %107 = vmatpush1.msra.mxu0 0.0
    %108 = vmatprep.subr.mxu0 0.0
    %109 = vmatpush1.msra.mxu0 0.0
    %110 = vmatprep.subr.mxu0 0.0
    %111 = vmatpush1.msra.mxu0 0.0
    %112 = vmatprep.subr.mxu0 0.0
    %113 = vmatpush1.msra.mxu0 0.0
    %114 = vmatprep.subr.mxu0 0.0
    %115 = vmatpush1.msra.mxu0 0.0
    %116 = vmatprep.subr.mxu0 0.0
    %117 = vmatpush1.msra.mxu0 0.0
    %118 = vmatprep.mubr.f32.mxu0 0.0
    %119 = vmatmul.mubr.f32.gmra.mrb[0].mxu0 %v49
    %v120 = vpop.f32.mrb[0].mxu0
    %v121 = vadd.f32 %v40, %v120
    %v122 = vpop.f32.mrb[0].mxu0
    %v123 = vadd.f32 %v40, %v122
    %124 = vmatprep.mubr.f32.mxu0 0.0
    %125 = vmatmul.mubr.f32.gmra.mrb[0].mxu0 %v52
    %v126 = vpop.f32.mrb[0].mxu0
    %v127 = vadd.f32 %v45, %v126
    %v128 = vpop.f32.mrb[0].mxu0
    %v129 = vadd.f32 %v45, %v128
    %130 = vdwg.mxu0
    %v131 = vmax.f32 %v121, 0.0
    %v132 = vmax.f32 %v123, 0.0
    %v133 = vmax.f32 %v127, 0.0
    %v134 = vmax.f32 %v129, 0.0
    %136 = vset.pattern.permute.xlu0 0
    %137 = vperm.xlu0 %136, %v31
    %v138 = vpop.permute.xlu0 %137
    %141 = vset.pattern.permute.xlu0 0
    %142 = vperm.xlu0 %141, %v32
    %v143 = vpop.permute.xlu0 %142
    %vm145 = vcmask 130048
    %v147 = vsel %vm145, %v29, 0
    %v150 = vsel %vm145, %v30, 0
    %152 = vmatprep.subr.mxu0 %v132
    %153 = vmatpush1.msra.mxu0 %v131
    %154 = vmatprep.subr.mxu0 %v134
    %155 = vmatpush1.msra.mxu0 %v133
    %156 = vmatprep.subr.mxu0 0.0
    %157 = vmatpush1.msra.mxu0 0.0
    %158 = vmatprep.subr.mxu0 0.0
    %159 = vmatpush1.msra.mxu0 0.0
    %160 = vmatprep.subr.mxu0 0.0
    %161 = vmatpush1.msra.mxu0 0.0
    %162 = vmatprep.subr.mxu0 0.0
    %163 = vmatpush1.msra.mxu0 0.0
    %164 = vmatprep.subr.mxu0 0.0
    %165 = vmatpush1.msra.mxu0 0.0
    %166 = vmatprep.subr.mxu0 0.0
    %167 = vmatpush1.msra.mxu0 0.0
    %168 = vmatprep.subr.mxu0 0.0
    %169 = vmatpush1.msra.mxu0 0.0
    %170 = vmatprep.subr.mxu0 0.0
    %171 = vmatpush1.msra.mxu0 0.0
    %172 = vmatprep.subr.mxu0 0.0
    %173 = vmatpush1.msra.mxu0 0.0
    %174 = vmatprep.subr.mxu0 0.0
    %175 = vmatpush1.msra.mxu0 0.0
    %176 = vmatprep.subr.mxu0 0.0
    %177 = vmatpush1.msra.mxu0 0.0
    %178 = vmatprep.subr.mxu0 0.0
    %179 = vmatpush1.msra.mxu0 0.0
    %180 = vmatprep.subr.mxu0 0.0
    %181 = vmatpush1.msra.mxu0 0.0
    %182 = vmatprep.subr.mxu0 0.0
    %183 = vmatpush1.msra.mxu0 0.0
    %184 = vmatprep.subr.mxu0 0.0
    %185 = vmatpush1.msra.mxu0 0.0
    %186 = vmatprep.subr.mxu0 0.0
    %187 = vmatpush1.msra.mxu0 0.0
    %188 = vmatprep.subr.mxu0 0.0
    %189 = vmatpush1.msra.mxu0 0.0
    %190 = vmatprep.subr.mxu0 0.0
    %191 = vmatpush1.msra.mxu0 0.0
    %192 = vmatprep.subr.mxu0 0.0
    %193 = vmatpush1.msra.mxu0 0.0
    %194 = vmatprep.subr.mxu0 0.0
    %195 = vmatpush1.msra.mxu0 0.0
    %196 = vmatprep.subr.mxu0 0.0
    %197 = vmatpush1.msra.mxu0 0.0
    %198 = vmatprep.subr.mxu0 0.0
    %199 = vmatpush1.msra.mxu0 0.0
    %200 = vmatprep.subr.mxu0 0.0
    %201 = vmatpush1.msra.mxu0 0.0
    %202 = vmatprep.subr.mxu0 0.0
    %203 = vmatpush1.msra.mxu0 0.0
    %204 = vmatprep.subr.mxu0 0.0
    %205 = vmatpush1.msra.mxu0 0.0
    %206 = vmatprep.subr.mxu0 0.0
    %207 = vmatpush1.msra.mxu0 0.0
    %208 = vmatprep.subr.mxu0 0.0
    %209 = vmatpush1.msra.mxu0 0.0
    %210 = vmatprep.subr.mxu0 0.0
    %211 = vmatpush1.msra.mxu0 0.0
    %212 = vmatprep.subr.mxu0 0.0
    %213 = vmatpush1.msra.mxu0 0.0
    %214 = vmatprep.subr.mxu0 0.0
    %215 = vmatpush1.msra.mxu0 0.0
    %216 = vmatprep.mubr.f32.mxu0 0.0
    %217 = vmatmul.mubr.f32.gmra.mrb[0].mxu0 %v147
    %v218 = vpop.f32.mrb[0].mxu0
    %v219 = vadd.f32 %v138, %v218
    %v220 = vpop.f32.mrb[0].mxu0
    %v221 = vadd.f32 %v138, %v220
    %222 = vmatprep.mubr.f32.mxu0 0.0
    %223 = vmatmul.mubr.f32.gmra.mrb[0].mxu0 %v150
    %v224 = vpop.f32.mrb[0].mxu0
    %v225 = vadd.f32 %v143, %v224
    %v226 = vpop.f32.mrb[0].mxu0
    %v227 = vadd.f32 %v143, %v226
    %228 = vdwg.mxu0
    %v229 = vmax.f32 %v219, 0.0
    %v230 = vmax.f32 %v221, 0.0
    %v231 = vmax.f32 %v225, 0.0
    %v232 = vmax.f32 %v227, 0.0
    %234 = vset.pattern.permute.xlu0 0
    %235 = vperm.xlu0 %234, %v34
    %v236 = vpop.permute.xlu0 %235
    %v239 = vsel %vm145, %v33, 0
    %241 = vmatprep.subr.mxu0 %v230
    %242 = vmatpush1.msra.mxu0 %v229
    %243 = vmatprep.subr.mxu0 %v232
    %244 = vmatpush1.msra.mxu0 %v231
    %245 = vmatprep.subr.mxu0 0.0
    %246 = vmatpush1.msra.mxu0 0.0
    %247 = vmatprep.subr.mxu0 0.0
    %248 = vmatpush1.msra.mxu0 0.0
    %249 = vmatprep.subr.mxu0 0.0
    %250 = vmatpush1.msra.mxu0 0.0
    %251 = vmatprep.subr.mxu0 0.0
    %252 = vmatpush1.msra.mxu0 0.0
    %253 = vmatprep.subr.mxu0 0.0
    %254 = vmatpush1.msra.mxu0 0.0
    %255 = vmatprep.subr.mxu0 0.0
    %256 = vmatpush1.msra.mxu0 0.0
    %257 = vmatprep.subr.mxu0 0.0
    %258 = vmatpush1.msra.mxu0 0.0
    %259 = vmatprep.subr.mxu0 0.0
    %260 = vmatpush1.msra.mxu0 0.0
    %261 = vmatprep.subr.mxu0 0.0
    %262 = vmatpush1.msra.mxu0 0.0
    %263 = vmatprep.subr.mxu0 0.0
    %264 = vmatpush1.msra.mxu0 0.0
    %265 = vmatprep.subr.mxu0 0.0
    %266 = vmatpush1.msra.mxu0 0.0
    %267 = vmatprep.subr.mxu0 0.0
    %268 = vmatpush1.msra.mxu0 0.0
    %269 = vmatprep.subr.mxu0 0.0
    %270 = vmatpush1.msra.mxu0 0.0
    %271 = vmatprep.subr.mxu0 0.0
    %272 = vmatpush1.msra.mxu0 0.0
    %273 = vmatprep.subr.mxu0 0.0
    %274 = vmatpush1.msra.mxu0 0.0
    %275 = vmatprep.subr.mxu0 0.0
    %276 = vmatpush1.msra.mxu0 0.0
    %277 = vmatprep.subr.mxu0 0.0
    %278 = vmatpush1.msra.mxu0 0.0
    %279 = vmatprep.subr.mxu0 0.0
    %280 = vmatpush1.msra.mxu0 0.0
    %281 = vmatprep.subr.mxu0 0.0
    %282 = vmatpush1.msra.mxu0 0.0
    %283 = vmatprep.subr.mxu0 0.0
    %284 = vmatpush1.msra.mxu0 0.0
    %285 = vmatprep.subr.mxu0 0.0
    %286 = vmatpush1.msra.mxu0 0.0
    %287 = vmatprep.subr.mxu0 0.0
    %288 = vmatpush1.msra.mxu0 0.0
    %289 = vmatprep.subr.mxu0 0.0
    %290 = vmatpush1.msra.mxu0 0.0
    %291 = vmatprep.subr.mxu0 0.0
    %292 = vmatpush1.msra.mxu0 0.0
    %293 = vmatprep.subr.mxu0 0.0
    %294 = vmatpush1.msra.mxu0 0.0
    %295 = vmatprep.subr.mxu0 0.0
    %296 = vmatpush1.msra.mxu0 0.0
    %297 = vmatprep.subr.mxu0 0.0
    %298 = vmatpush1.msra.mxu0 0.0
    %299 = vmatprep.subr.mxu0 0.0
    %300 = vmatpush1.msra.mxu0 0.0
    %301 = vmatprep.subr.mxu0 0.0
    %302 = vmatpush1.msra.mxu0 0.0
    %303 = vmatprep.subr.mxu0 0.0
    %304 = vmatpush1.msra.mxu0 0.0
    %305 = vmatprep.mubr.f32.mxu0 0.0
    %306 = vmatmul.mubr.f32.gmra.mrb[0].mxu0 %v239
    %v307 = vpop.f32.mrb[0].mxu0
    %v308 = vadd.f32 %v236, %v307
    %v309 = vpop.f32.mrb[0].mxu0
    %v310 = vadd.f32 %v236, %v309
    %311 = vdwg.mxu0
    %312 = vst [vmem:[%s2] sm:$0xff] %v308
    %313 = vst [vmem:[%s2 + $0x8] sm:$0xff] %v310
    // Predicated region
    $region14: #{dqn_forward.1} parent=1 // pred_check
      _
    $region15: #{dqn_forward.1} parent=1 // pred_check_branch
      %315 = sbr.rel (0) target = $region17
    $region16: #{dqn_forward.1} parent=1 // pred_region
      _
    $region17: #{dqn_forward.1} parent=1 // pred_fallthru
      _
    // Predicated region
    $region18: #{dqn_forward.1} parent=1 // pred_check
      _
    $region19: #{dqn_forward.1} parent=1 // pred_check_branch
      %317 = sbr.rel (0) target = $region21
    $region20: #{dqn_forward.1} parent=1 // pred_region
      _
    $region21: #{dqn_forward.1} parent=1 // pred_fallthru
      _
    %318 = vsyncpa [#allocation3], 1

</llo_original>
